<compile_context>
chip_gen: v7x
topology: tpu7x:2x2x1
jax: 0.10.0
libtpu: 0.0.40
codegen_flags: <defaults>
</compile_context>

<pallas_src>
import functools

import jax
import jax.numpy as jnp
import numpy as np
from jax.experimental import pallas as pl
from jax.experimental.pallas import tpu as pltpu


def _dsconv_kernel(k, W, dot_in_bf16, x_ref, mask_ref, w1_ref, b1_ref, w2_ref,
                   b2_ref, o_ref):
    pd = k // 2
    x = x_ref[...]                       # (C, L) f32 -- single load, also residual
    L = x.shape[1]
    masks = mask_ref[...]                # (k*k, L) f32 {0,1}, trace-time constant

    # Depthwise KxK conv: per-tap static lane rolls (XLU) + precomputed
    # boundary masks (which also kill cross-image wrap in the flattened batch).
    acc = jnp.zeros(x.shape, jnp.float32)
    for dh in range(k):
        for dw in range(k):
            t = dh * k + dw
            s = (dh - pd) * W + (dw - pd)        # flat source offset
            shifted = x if s == 0 else pltpu.roll(x, shift=(-s) % L, axis=1)
            if not (dh == pd and dw == pd):      # center tap needs no mask
                shifted = shifted * masks[t:t + 1, :]
            acc = acc + w1_ref[t] * shifted      # tap weight: (C, 1)

    # BN1 folded into the taps; only bias + ReLU left.
    y = jnp.maximum(acc + b1_ref[...], 0.0)

    # 1x1 pointwise conv on the MXU (BN2 scale folded into w2); bias + ReLU.
    w2 = w2_ref[...]
    if dot_in_bf16:
        y2 = jnp.dot(w2.astype(jnp.bfloat16), y.astype(jnp.bfloat16),
                     preferred_element_type=jnp.float32)
    else:
        y2 = jnp.dot(w2, y, preferred_element_type=jnp.float32)
    y2 = jnp.maximum(y2 + b2_ref[...], 0.0)

    # Residual add (reuses the single x load).
    o_ref[...] = (y2 + x).astype(o_ref.dtype)


def dsconv_pallas(x, w1_dw, bn1, w2, bn2, kernel, *, dot_in_bf16=False):
    """x: (N, C, H, W) f32.  w1_dw: (C, 1, k, k) depthwise weight.
    bn*: (gamma, beta, running_mean, running_var).  w2: (Cout, C)."""
    # TODO(synk): only expansion=1 (pure depthwise, groups == channels) is
    # implemented; expansion > 1 would need a channel-gather for the grouped conv.
    N, C, H, W = x.shape
    k = kernel
    HW = H * W
    Cout = w2.shape[0]
    assert Cout == C, "residual add requires out_channels == channels"
    eps = 1e-5

    g1, be1, m1, v1 = bn1
    g2, be2, m2, v2 = bn2
    s1 = g1 / jnp.sqrt(v1 + eps)                       # (C,)
    b1 = (be1 - m1 * s1).reshape(C, 1)
    s2 = g2 / jnp.sqrt(v2 + eps)                       # (Cout,)
    b2 = (be2 - m2 * s2).reshape(Cout, 1)

    # Fold BN1 scale into the depthwise taps: (C,1,k,k) -> (k*k, C, 1).
    w1_sc = w1_dw[:, 0] * s1[:, None, None]            # (C, k, k)
    w1_k = jnp.transpose(w1_sc, (1, 2, 0)).reshape(k * k, C)[:, :, None]

    # Fold BN2 scale into the 1x1 conv rows.
    w2f = w2 * s2[:, None]                             # (Cout, C)

    # Flatten the batch into the lane dimension: (N,C,H,W) -> (C, N*HW).
    xf = jnp.transpose(x, (1, 0, 2, 3)).reshape(C, N * HW)

    # Grid-step selection: collapse the batch into as few steps as possible
    # (the ~0.35us fixed per-step overhead dominates at these sizes) while
    # keeping 2 parallel steps for v7x's two TensorCores whenever each step
    # still gets >= 512 image-aligned lanes (multiple of 128 for lane-dense
    # stores).
    # TODO(synk): for scaled-up C/H/W, re-derive the VMEM budget (v7x: 64 MiB),
    # add more spatial steps / pl.Buffered(3) on x / vmem_limit_bytes, and pad
    # the flat spatial dim to a multiple of 128 if H*W is not one already.
    steps = 1
    if N % 2 == 0 and (N // 2) * HW >= 512 and ((N // 2) * HW) % 128 == 0:
        steps = 2
    imgs_per_step = N // steps
    L = imgs_per_step * HW

    # Per-tap "source pixel inside the image" masks, precomputed at trace time
    # (removes ~20 VPU integer compare/and ops per step and one DMA stream).
    pd = k // 2
    hh = np.repeat(np.arange(H), W)
    ww = np.tile(np.arange(W), H)
    mask = np.ones((k * k, HW), np.float32)
    for dh in range(k):
        for dw in range(k):
            valid = ((hh + dh - pd >= 0) & (hh + dh - pd < H) &
                     (ww + dw - pd >= 0) & (ww + dw - pd < W))
            mask[dh * k + dw] = valid.astype(np.float32)
    mask = jnp.asarray(np.tile(mask, (1, imgs_per_step)))   # (k*k, L)

    kern = functools.partial(_dsconv_kernel, k, W, dot_in_bf16)
    out = pl.pallas_call(
        kern,
        # TODO(synk): emit bf16 here instead if downstream layers accept it
        # (halves HBM writeback once step overhead is amortized).
        out_shape=jax.ShapeDtypeStruct((Cout, N * HW), x.dtype),
        grid=(steps,),
        in_specs=[
            pl.BlockSpec((C, L), lambda t: (0, t)),            # x (read once)
            pl.BlockSpec((k * k, L), lambda t: (0, 0)),        # boundary masks
            pl.BlockSpec((k * k, C, 1), lambda t: (0, 0, 0)),  # folded dw taps
            pl.BlockSpec((C, 1), lambda t: (0, 0)),            # bn1 bias
            pl.BlockSpec((Cout, C), lambda t: (0, 0)),         # folded 1x1 w
            pl.BlockSpec((Cout, 1), lambda t: (0, 0)),         # bn2 bias
        ],
        out_specs=pl.BlockSpec((Cout, L), lambda t: (0, t)),
        compiler_params=pltpu.CompilerParams(
            dimension_semantics=("parallel",)),
    )(xf, mask, w1_k, b1, w2f, b2)

    return jnp.transpose(out.reshape(Cout, N, H, W), (1, 0, 2, 3))


def dsconv_ref(x, w1_dw, bn1, w2, bn2, k):
    """Pure-JAX reference matching the PyTorch module in eval() mode."""
    eps = 1e-5
    p = k // 2
    C = x.shape[1]

    def bn(y, params):
        g, be, m, v = params
        return (y - m[None, :, None, None]) / jnp.sqrt(v + eps)[None, :, None, None] \
            * g[None, :, None, None] + be[None, :, None, None]

    y = jax.lax.conv_general_dilated(
        x, w1_dw, (1, 1), ((p, p), (p, p)),
        feature_group_count=C, dimension_numbers=('NCHW', 'OIHW', 'NCHW'))
    y = jnp.maximum(bn(y, bn1), 0.0)
    y = jax.lax.conv_general_dilated(
        y, w2[:, :, None, None], (1, 1), ((0, 0), (0, 0)),
        dimension_numbers=('NCHW', 'OIHW', 'NCHW'))
    y = jnp.maximum(bn(y, bn2), 0.0)
    return y + x


if __name__ == "__main__":
    key = jax.random.PRNGKey(0)
    ks = jax.random.split(key, 12)

    # DSConv(kernel=3, channels=8, expansion=1) -> expanded = out_channels = 8
    N, C, H, W = 2, 8, 16, 16
    k = 3

    x = jax.random.normal(ks[0], (N, C, H, W), jnp.float32)
    w1_dw = 0.3 * jax.random.normal(ks[1], (C, 1, k, k), jnp.float32)   # depthwise
    w2 = 0.3 * jax.random.normal(ks[2], (C, C), jnp.float32)            # 1x1 conv

    bn1 = (jax.random.uniform(ks[3], (C,), minval=0.5, maxval=1.5),
           0.1 * jax.random.normal(ks[4], (C,)),
           0.1 * jax.random.normal(ks[5], (C,)),
           jax.random.uniform(ks[6], (C,), minval=0.5, maxval=1.5))
    bn2 = (jax.random.uniform(ks[7], (C,), minval=0.5, maxval=1.5),
           0.1 * jax.random.normal(ks[8], (C,)),
           0.1 * jax.random.normal(ks[9], (C,)),
           jax.random.uniform(ks[10], (C,), minval=0.5, maxval=1.5))

    ref = dsconv_ref(x, w1_dw, bn1, w2, bn2, k)

    # f32-dot path (matches the f32 reference tightly). With N=2, HW=256 the
    # whole batch is flattened into one 512-lane step, so this also validates
    # that the boundary masks block cross-image leakage from the lane rolls.
    out = jax.block_until_ready(dsconv_pallas(x, w1_dw, bn1, w2, bn2, k))
    np.testing.assert_allclose(np.asarray(out), np.asarray(ref),
                               rtol=2e-4, atol=2e-4)

    # bf16-at-the-dot path (f32 accumulation): negligible win at C=8 but 3-8x
    # MXU rate once channels scale; looser tolerance for bf16 operand rounding.
    out_bf = jax.block_until_ready(
        dsconv_pallas(x, w1_dw, bn1, w2, bn2, k, dot_in_bf16=True))
    np.testing.assert_allclose(np.asarray(out_bf), np.asarray(ref),
                               rtol=5e-2, atol=5e-2)

    print("KERNEL_OK")
</pallas_src>

<mosaic_0001>
module attributes {stable_mosaic.version = 11 : i64} {
  func.func @_dsconv_kernel(%arg0: i32, %arg1: memref<8x512xf32, #tpu.memory_space<vmem>>, %arg2: memref<9x512xf32, #tpu.memory_space<vmem>>, %arg3: memref<9x8x1xf32, #tpu.memory_space<vmem>>, %arg4: memref<8x1xf32, #tpu.memory_space<vmem>>, %arg5: memref<8x8xf32, #tpu.memory_space<vmem>>, %arg6: memref<8x1xf32, #tpu.memory_space<vmem>>, %arg7: memref<8x512xf32, #tpu.memory_space<vmem>>) attributes {dimension_semantics = [#tpu.dimension_semantics<parallel>], iteration_bounds = array<i64: 1>, scalar_prefetch = 0 : i64, scratch_operands = 0 : i64, tpu.core_type = #tpu.core_type<tc>, window_params = [{transform_indices = @transform_0, window_bounds = array<i64: 8, 512>}, {pipeline_mode = #tpu.pipeline_mode<synchronous>, transform_indices = @transform_1, window_bounds = array<i64: 9, 512>}, {pipeline_mode = #tpu.pipeline_mode<synchronous>, transform_indices = @transform_2, window_bounds = array<i64: 9, 8, 1>}, {pipeline_mode = #tpu.pipeline_mode<synchronous>, transform_indices = @transform_3, window_bounds = array<i64: 8, 1>}, {pipeline_mode = #tpu.pipeline_mode<synchronous>, transform_indices = @transform_4, window_bounds = array<i64: 8, 8>}, {pipeline_mode = #tpu.pipeline_mode<synchronous>, transform_indices = @transform_5, window_bounds = array<i64: 8, 1>}, {transform_indices = @transform_6, window_bounds = array<i64: 8, 512>}]} {
    %c0 = arith.constant 0 : index
    %c0_0 = arith.constant 0 : index
    %0 = vector.load %arg1[%c0, %c0_0] : memref<8x512xf32, #tpu.memory_space<vmem>>, vector<8x512xf32>
    %c0_1 = arith.constant 0 : index
    %c0_2 = arith.constant 0 : index
    %1 = vector.load %arg2[%c0_1, %c0_2] : memref<9x512xf32, #tpu.memory_space<vmem>>, vector<9x512xf32>
    %cst = arith.constant 0.000000e+00 : f32
    %2 = vector.broadcast %cst : f32 to vector<8x512xf32>
    %c17_i32 = arith.constant 17 : i32
    %3 = tpu.dynamic_rotate %0 by %c17_i32 dim 1 : vector<8x512xf32>, i32 -> vector<8x512xf32>
    %4 = vector.extract_strided_slice %1 {offsets = [0, 0], sizes = [1, 512], strides = [1, 1]} : vector<9x512xf32> to vector<1x512xf32>
    %5 = vector.broadcast %4 : vector<1x512xf32> to vector<8x512xf32>
    %6 = arith.mulf %3, %5 : vector<8x512xf32>
    %c0_3 = arith.constant 0 : index
    %c0_4 = arith.constant 0 : index
    %c0_5 = arith.constant 0 : index
    %7 = vector.load %arg3[%c0_3, %c0_4, %c0_5] : memref<9x8x1xf32, #tpu.memory_space<vmem>>, vector<1x8x1xf32>
    %8 = vector.shape_cast %7 : vector<1x8x1xf32> to vector<8x1xf32>
    %9 = vector.broadcast %8 : vector<8x1xf32> to vector<8x512xf32>
    %10 = arith.mulf %9, %6 : vector<8x512xf32>
    %11 = arith.addf %2, %10 : vector<8x512xf32>
    %c16_i32 = arith.constant 16 : i32
    %12 = tpu.dynamic_rotate %0 by %c16_i32 dim 1 : vector<8x512xf32>, i32 -> vector<8x512xf32>
    %13 = vector.extract_strided_slice %1 {offsets = [1, 0], sizes = [1, 512], strides = [1, 1]} : vector<9x512xf32> to vector<1x512xf32>
    %14 = vector.broadcast %13 : vector<1x512xf32> to vector<8x512xf32>
    %15 = arith.mulf %12, %14 : vector<8x512xf32>
    %c1 = arith.constant 1 : index
    %c0_6 = arith.constant 0 : index
    %c0_7 = arith.constant 0 : index
    %16 = vector.load %arg3[%c1, %c0_6, %c0_7] : memref<9x8x1xf32, #tpu.memory_space<vmem>>, vector<1x8x1xf32>
    %17 = vector.shape_cast %16 : vector<1x8x1xf32> to vector<8x1xf32>
    %18 = vector.broadcast %17 : vector<8x1xf32> to vector<8x512xf32>
    %19 = arith.mulf %18, %15 : vector<8x512xf32>
    %20 = arith.addf %11, %19 : vector<8x512xf32>
    %c15_i32 = arith.constant 15 : i32
    %21 = tpu.dynamic_rotate %0 by %c15_i32 dim 1 : vector<8x512xf32>, i32 -> vector<8x512xf32>
    %22 = vector.extract_strided_slice %1 {offsets = [2, 0], sizes = [1, 512], strides = [1, 1]} : vector<9x512xf32> to vector<1x512xf32>
    %23 = vector.broadcast %22 : vector<1x512xf32> to vector<8x512xf32>
    %24 = arith.mulf %21, %23 : vector<8x512xf32>
    %c2 = arith.constant 2 : index
    %c0_8 = arith.constant 0 : index
    %c0_9 = arith.constant 0 : index
    %25 = vector.load %arg3[%c2, %c0_8, %c0_9] : memref<9x8x1xf32, #tpu.memory_space<vmem>>, vector<1x8x1xf32>
    %26 = vector.shape_cast %25 : vector<1x8x1xf32> to vector<8x1xf32>
    %27 = vector.broadcast %26 : vector<8x1xf32> to vector<8x512xf32>
    %28 = arith.mulf %27, %24 : vector<8x512xf32>
    %29 = arith.addf %20, %28 : vector<8x512xf32>
    %c1_i32 = arith.constant 1 : i32
    %30 = tpu.dynamic_rotate %0 by %c1_i32 dim 1 : vector<8x512xf32>, i32 -> vector<8x512xf32>
    %31 = vector.extract_strided_slice %1 {offsets = [3, 0], sizes = [1, 512], strides = [1, 1]} : vector<9x512xf32> to vector<1x512xf32>
    %32 = vector.broadcast %31 : vector<1x512xf32> to vector<8x512xf32>
    %33 = arith.mulf %30, %32 : vector<8x512xf32>
    %c3 = arith.constant 3 : index
    %c0_10 = arith.constant 0 : index
    %c0_11 = arith.constant 0 : index
    %34 = vector.load %arg3[%c3, %c0_10, %c0_11] : memref<9x8x1xf32, #tpu.memory_space<vmem>>, vector<1x8x1xf32>
    %35 = vector.shape_cast %34 : vector<1x8x1xf32> to vector<8x1xf32>
    %36 = vector.broadcast %35 : vector<8x1xf32> to vector<8x512xf32>
    %37 = arith.mulf %36, %33 : vector<8x512xf32>
    %38 = arith.addf %29, %37 : vector<8x512xf32>
    %c4 = arith.constant 4 : index
    %c0_12 = arith.constant 0 : index
    %c0_13 = arith.constant 0 : index
    %39 = vector.load %arg3[%c4, %c0_12, %c0_13] : memref<9x8x1xf32, #tpu.memory_space<vmem>>, vector<1x8x1xf32>
    %40 = vector.shape_cast %39 : vector<1x8x1xf32> to vector<8x1xf32>
    %41 = vector.broadcast %40 : vector<8x1xf32> to vector<8x512xf32>
    %42 = arith.mulf %41, %0 : vector<8x512xf32>
    %43 = arith.addf %38, %42 : vector<8x512xf32>
    %c511_i32 = arith.constant 511 : i32
    %44 = tpu.dynamic_rotate %0 by %c511_i32 dim 1 : vector<8x512xf32>, i32 -> vector<8x512xf32>
    %45 = vector.extract_strided_slice %1 {offsets = [5, 0], sizes = [1, 512], strides = [1, 1]} : vector<9x512xf32> to vector<1x512xf32>
    %46 = vector.broadcast %45 : vector<1x512xf32> to vector<8x512xf32>
    %47 = arith.mulf %44, %46 : vector<8x512xf32>
    %c5 = arith.constant 5 : index
    %c0_14 = arith.constant 0 : index
    %c0_15 = arith.constant 0 : index
    %48 = vector.load %arg3[%c5, %c0_14, %c0_15] : memref<9x8x1xf32, #tpu.memory_space<vmem>>, vector<1x8x1xf32>
    %49 = vector.shape_cast %48 : vector<1x8x1xf32> to vector<8x1xf32>
    %50 = vector.broadcast %49 : vector<8x1xf32> to vector<8x512xf32>
    %51 = arith.mulf %50, %47 : vector<8x512xf32>
    %52 = arith.addf %43, %51 : vector<8x512xf32>
    %c497_i32 = arith.constant 497 : i32
    %53 = tpu.dynamic_rotate %0 by %c497_i32 dim 1 : vector<8x512xf32>, i32 -> vector<8x512xf32>
    %54 = vector.extract_strided_slice %1 {offsets = [6, 0], sizes = [1, 512], strides = [1, 1]} : vector<9x512xf32> to vector<1x512xf32>
    %55 = vector.broadcast %54 : vector<1x512xf32> to vector<8x512xf32>
    %56 = arith.mulf %53, %55 : vector<8x512xf32>
    %c6 = arith.constant 6 : index
    %c0_16 = arith.constant 0 : index
    %c0_17 = arith.constant 0 : index
    %57 = vector.load %arg3[%c6, %c0_16, %c0_17] : memref<9x8x1xf32, #tpu.memory_space<vmem>>, vector<1x8x1xf32>
    %58 = vector.shape_cast %57 : vector<1x8x1xf32> to vector<8x1xf32>
    %59 = vector.broadcast %58 : vector<8x1xf32> to vector<8x512xf32>
    %60 = arith.mulf %59, %56 : vector<8x512xf32>
    %61 = arith.addf %52, %60 : vector<8x512xf32>
    %c496_i32 = arith.constant 496 : i32
    %62 = tpu.dynamic_rotate %0 by %c496_i32 dim 1 : vector<8x512xf32>, i32 -> vector<8x512xf32>
    %63 = vector.extract_strided_slice %1 {offsets = [7, 0], sizes = [1, 512], strides = [1, 1]} : vector<9x512xf32> to vector<1x512xf32>
    %64 = vector.broadcast %63 : vector<1x512xf32> to vector<8x512xf32>
    %65 = arith.mulf %62, %64 : vector<8x512xf32>
    %c7 = arith.constant 7 : index
    %c0_18 = arith.constant 0 : index
    %c0_19 = arith.constant 0 : index
    %66 = vector.load %arg3[%c7, %c0_18, %c0_19] : memref<9x8x1xf32, #tpu.memory_space<vmem>>, vector<1x8x1xf32>
    %67 = vector.shape_cast %66 : vector<1x8x1xf32> to vector<8x1xf32>
    %68 = vector.broadcast %67 : vector<8x1xf32> to vector<8x512xf32>
    %69 = arith.mulf %68, %65 : vector<8x512xf32>
    %70 = arith.addf %61, %69 : vector<8x512xf32>
    %c495_i32 = arith.constant 495 : i32
    %71 = tpu.dynamic_rotate %0 by %c495_i32 dim 1 : vector<8x512xf32>, i32 -> vector<8x512xf32>
    %72 = vector.extract_strided_slice %1 {offsets = [8, 0], sizes = [1, 512], strides = [1, 1]} : vector<9x512xf32> to vector<1x512xf32>
    %73 = vector.broadcast %72 : vector<1x512xf32> to vector<8x512xf32>
    %74 = arith.mulf %71, %73 : vector<8x512xf32>
    %c8 = arith.constant 8 : index
    %c0_20 = arith.constant 0 : index
    %c0_21 = arith.constant 0 : index
    %75 = vector.load %arg3[%c8, %c0_20, %c0_21] : memref<9x8x1xf32, #tpu.memory_space<vmem>>, vector<1x8x1xf32>
    %76 = vector.shape_cast %75 : vector<1x8x1xf32> to vector<8x1xf32>
    %77 = vector.broadcast %76 : vector<8x1xf32> to vector<8x512xf32>
    %78 = arith.mulf %77, %74 : vector<8x512xf32>
    %79 = arith.addf %70, %78 : vector<8x512xf32>
    %c0_22 = arith.constant 0 : index
    %c0_23 = arith.constant 0 : index
    %80 = vector.load %arg4[%c0_22, %c0_23] : memref<8x1xf32, #tpu.memory_space<vmem>>, vector<8x1xf32>
    %81 = vector.broadcast %80 : vector<8x1xf32> to vector<8x512xf32>
    %82 = arith.addf %79, %81 : vector<8x512xf32>
    %cst_24 = arith.constant 0.000000e+00 : f32
    %83 = vector.broadcast %cst_24 : f32 to vector<8x512xf32>
    %84 = arith.maximumf %82, %83 : vector<8x512xf32>
    %c0_25 = arith.constant 0 : index
    %c0_26 = arith.constant 0 : index
    %85 = vector.load %arg5[%c0_25, %c0_26] : memref<8x8xf32, #tpu.memory_space<vmem>>, vector<8x8xf32>
    %cst_27 = arith.constant dense<0.000000e+00> : vector<8x512xf32>
    %86 = tpu.matmul %85, %84, %cst_27 {dimension_numbers = #tpu.dot_dimension_numbers<[1], [0], [0], [1], [0, 0, 1, 1], [], []>} : vector<8x8xf32>, vector<8x512xf32>, vector<8x512xf32> -> vector<8x512xf32>
    %c0_28 = arith.constant 0 : index
    %c0_29 = arith.constant 0 : index
    %87 = vector.load %arg6[%c0_28, %c0_29] : memref<8x1xf32, #tpu.memory_space<vmem>>, vector<8x1xf32>
    %88 = vector.broadcast %87 : vector<8x1xf32> to vector<8x512xf32>
    %89 = arith.addf %86, %88 : vector<8x512xf32>
    %cst_30 = arith.constant 0.000000e+00 : f32
    %90 = vector.broadcast %cst_30 : f32 to vector<8x512xf32>
    %91 = arith.maximumf %89, %90 : vector<8x512xf32>
    %92 = arith.addf %91, %0 : vector<8x512xf32>
    %c0_31 = arith.constant 0 : index
    %c0_32 = arith.constant 0 : index
    %93 = vector.load %arg7[%c0_31, %c0_32] : memref<8x512xf32, #tpu.memory_space<vmem>>, vector<8x512xf32>
    tpu.vector_store %arg7[%c0_31, %c0_32], %92 {strides = array<i32>} : memref<8x512xf32, #tpu.memory_space<vmem>>, vector<8x512xf32>,
    return
  }
  func.func @transform_0(%arg0: i32) -> (i32, i32) {
    %c0_i32 = arith.constant 0 : i32
    %c0_i32_0 = arith.constant 0 : i32
    return %c0_i32, %arg0 : i32, i32
  }
  func.func @transform_1(%arg0: i32) -> (i32, i32) {
    %c0_i32 = arith.constant 0 : i32
    %c0_i32_0 = arith.constant 0 : i32
    %c0_i32_1 = arith.constant 0 : i32
    return %c0_i32, %c0_i32_0 : i32, i32
  }
  func.func @transform_2(%arg0: i32) -> (i32, i32, i32) {
    %c0_i32 = arith.constant 0 : i32
    %c0_i32_0 = arith.constant 0 : i32
    %c0_i32_1 = arith.constant 0 : i32
    %c0_i32_2 = arith.constant 0 : i32
    return %c0_i32, %c0_i32_0, %c0_i32_1 : i32, i32, i32
  }
  func.func @transform_3(%arg0: i32) -> (i32, i32) {
    %c0_i32 = arith.constant 0 : i32
    %c0_i32_0 = arith.constant 0 : i32
    %c0_i32_1 = arith.constant 0 : i32
    return %c0_i32, %c0_i32_0 : i32, i32
  }
  func.func @transform_4(%arg0: i32) -> (i32, i32) {
    %c0_i32 = arith.constant 0 : i32
    %c0_i32_0 = arith.constant 0 : i32
    %c0_i32_1 = arith.constant 0 : i32
    return %c0_i32, %c0_i32_0 : i32, i32
  }
  func.func @transform_5(%arg0: i32) -> (i32, i32) {
    %c0_i32 = arith.constant 0 : i32
    %c0_i32_0 = arith.constant 0 : i32
    %c0_i32_1 = arith.constant 0 : i32
    return %c0_i32, %c0_i32_0 : i32, i32
  }
  func.func @transform_6(%arg0: i32) -> (i32, i32) {
    %c0_i32 = arith.constant 0 : i32
    %c0_i32_0 = arith.constant 0 : i32
    return %c0_i32, %arg0 : i32, i32
  }
}

</mosaic_0001>

<llo_original>
// kernel: tpu_custom_call.1
$region0: #{tpu_custom_call.1}
  #allocation0 [shape = 'u32[]', space=smem, size = 0x4, offset = 0x4, fixed_abs, tag = 'smem constant byte address 0x4 - core index']
  #allocation1 [shape = 'u32[144,128]{1,0:T(1,128)}', space=vmem, size = 0x12000, scoped, tag = 'internal scratch']
  %s0 = inlined_call_operand.vmem [shape: f32[8,512], index: 0, kind: input, shape index: {}]
  %s1 = inlined_call_operand.vmem [shape: f32[9,512], index: 1, kind: input, shape index: {}]
  %s2 = inlined_call_operand.vmem [shape: f32[9,8,1], index: 2, kind: input, shape index: {}]
  %s3 = inlined_call_operand.vmem [shape: f32[8,1], index: 3, kind: input, shape index: {}]
  %s4 = inlined_call_operand.vmem [shape: f32[8,8], index: 4, kind: input, shape index: {}]
  %s5 = inlined_call_operand.vmem [shape: f32[8,1], index: 5, kind: input, shape index: {}]
  %s6 = inlined_call_operand.hbm [shape: f32[8,512], index: 6, kind: output, shape index: {}]
  %s7 = sld [smem:[#allocation0]]
  $region34: #{tpu_custom_call.1} parent=0
    _
  %s9 = ssub.s32 1, %s7
  %s10 = scalar_select 0, %s9, %s7
  $region1: #{tpu_custom_call.1} parent=0
    #allocation2 [shape = 'u8[16384]{0}', space=vmem, size = 0x4000, scoped, tag = 'output window, operand 0, single buffered']
    #allocation3 [shape = 's32[1]{0}', space=sflag, size = 0x4, scoped, tag = 'scoped memory for tpu_custom_call.1']
    %11 = vsyncpa [#allocation3], 0
    // Predicated region
    $region2: #{tpu_custom_call.1} parent=1 // pred_check
      _
    $region3: #{tpu_custom_call.1} parent=1 // pred_check_branch
      %13 = sbr.rel (0) target = $region5
    $region4: #{tpu_custom_call.1} parent=1 // pred_region
      _
    $region5: #{tpu_custom_call.1} parent=1 // pred_fallthru
      _
    // Predicated region
    $region6: #{tpu_custom_call.1} parent=1 // pred_check
      _
    $region7: #{tpu_custom_call.1} parent=1 // pred_check_branch
      %15 = sbr.rel (0) target = $region9
    $region8: #{tpu_custom_call.1} parent=1 // pred_region
      _
    $region9: #{tpu_custom_call.1} parent=1 // pred_fallthru
      _
    // Predicated region
    $region10: #{tpu_custom_call.1} parent=1 // pred_check
      _
    $region11: #{tpu_custom_call.1} parent=1 // pred_check_branch
      %17 = sbr.rel (0) target = $region13
    $region12: #{tpu_custom_call.1} parent=1 // pred_region
      _
    $region13: #{tpu_custom_call.1} parent=1 // pred_fallthru
      _
    // Predicated region
    $region14: #{tpu_custom_call.1} parent=1 // pred_check
      _
    $region15: #{tpu_custom_call.1} parent=1 // pred_check_branch
      %19 = sbr.rel (0) target = $region17
    $region16: #{tpu_custom_call.1} parent=1 // pred_region
      _
    $region17: #{tpu_custom_call.1} parent=1 // pred_fallthru
      _
    // Predicated region
    $region18: #{tpu_custom_call.1} parent=1 // pred_check
      _
    $region19: #{tpu_custom_call.1} parent=1 // pred_check_branch
      %21 = sbr.rel (0) target = $region21
    $region20: #{tpu_custom_call.1} parent=1 // pred_region
      _
    $region21: #{tpu_custom_call.1} parent=1 // pred_fallthru
      _
    // Predicated region
    $region22: #{tpu_custom_call.1} parent=1 // pred_check
      _
    $region23: #{tpu_custom_call.1} parent=1 // pred_check_branch
      %23 = sbr.rel (0) target = $region25
    $region24: #{tpu_custom_call.1} parent=1 // pred_region
      _
    $region25: #{tpu_custom_call.1} parent=1 // pred_fallthru
      _
    %v24 = vld [vmem:[%s0] sm:$0xff]
    %v25 = vld [vmem:[%s0 + $0x8] sm:$0xff]
    %v26 = vld [vmem:[%s0 + $0x10] sm:$0xff]
    %v27 = vld [vmem:[%s0 + $0x18] sm:$0xff]
    %v28 = vld [vmem:[%s1] sm:$0xff]
    %v29 = vld [vmem:[%s1 + $0x8] sm:$0xff]
    %v30 = vld [vmem:[%s1 + $0x10] sm:$0xff]
    %v31 = vld [vmem:[%s1 + $0x18] sm:$0xff]
    %v32 = vld [vmem:[%s1 + $0x20] sm:$0x1]
    %v33 = vld [vmem:[%s1 + $0x28] sm:$0x1]
    %v34 = vld [vmem:[%s1 + $0x30] sm:$0x1]
    %v35 = vld [vmem:[%s1 + $0x38] sm:$0x1]
    %36 = vrot.lane.b32.xlu0 %v24, 17
    %v37 = vpop.permute.xlu0 %36
    %38 = vrot.lane.b32.xlu0 %v25, 17
    %v39 = vpop.permute.xlu0 %38
    %40 = vrot.lane.b32.xlu0 %v26, 17
    %v41 = vpop.permute.xlu0 %40
    %42 = vrot.lane.b32.xlu0 %v27, 17
    %v43 = vpop.permute.xlu0 %42
    %v44 = vlaneseq
    %v45 = vand.u32 %v44, 127
    %vm46 = vcmp.lt.s32.totalorder %v45, 17
    %v47 = vsel %vm46, %v41, %v43
    %v48 = vsel %vm46, %v39, %v41
    %v49 = vsel %vm46, %v37, %v39
    %v50 = vsel %vm46, %v43, %v37
    %v51 = vlaneseq
    %v52 = vshrl.u32 %v51, 7
    %v53 = vsub.s32 0, %v52
    %v54 = vrot.slane %v28, %v53
    %v55 = vlaneseq
    %v56 = vshrl.u32 %v55, 7
    %v57 = vsub.s32 0, %v56
    %v58 = vrot.slane %v29, %v57
    %v59 = vlaneseq
    %v60 = vshrl.u32 %v59, 7
    %v61 = vsub.s32 0, %v60
    %v62 = vrot.slane %v30, %v61
    %v63 = vlaneseq
    %v64 = vshrl.u32 %v63, 7
    %v65 = vsub.s32 0, %v64
    %v66 = vrot.slane %v31, %v65
    %v67 = vmul.f32 %v50, %v54
    %v68 = vmul.f32 %v49, %v58
    %v69 = vmul.f32 %v48, %v62
    %v70 = vmul.f32 %v47, %v66
    %v71 = vld [vmem:[%s2] sm:$0xff]
    %73 = vset.pattern.permute.xlu0 0
    %74 = vperm.xlu0 %73, %v71
    %v75 = vpop.permute.xlu0 %74
    %v77 = vmul.f32 %v75, %v67
    %v78 = vmul.f32 %v75, %v68
    %v79 = vmul.f32 %v75, %v69
    %v80 = vmul.f32 %v75, %v70
    %v81 = vadd.f32 %v77, 0.0
    %v82 = vadd.f32 %v78, 0.0
    %v83 = vadd.f32 %v79, 0.0
    %v84 = vadd.f32 %v80, 0.0
    %85 = vrot.lane.b32.xlu0 %v24, 16
    %v86 = vpop.permute.xlu0 %85
    %87 = vrot.lane.b32.xlu0 %v25, 16
    %v88 = vpop.permute.xlu0 %87
    %89 = vrot.lane.b32.xlu0 %v26, 16
    %v90 = vpop.permute.xlu0 %89
    %91 = vrot.lane.b32.xlu0 %v27, 16
    %v92 = vpop.permute.xlu0 %91
    %vm93 = vcmp.lt.s32.totalorder %v45, 16
    %v94 = vsel %vm93, %v90, %v92
    %v95 = vsel %vm93, %v88, %v90
    %v96 = vsel %vm93, %v86, %v88
    %v97 = vsel %vm93, %v92, %v86
    %v98 = vlaneseq
    %v99 = vshrl.u32 %v98, 7
    %v100 = vsub.s32 1, %v99
    %v101 = vrot.slane %v28, %v100
    %v102 = vlaneseq
    %v103 = vshrl.u32 %v102, 7
    %v104 = vsub.s32 1, %v103
    %v105 = vrot.slane %v29, %v104
    %v106 = vlaneseq
    %v107 = vshrl.u32 %v106, 7
    %v108 = vsub.s32 1, %v107
    %v109 = vrot.slane %v30, %v108
    %v110 = vlaneseq
    %v111 = vshrl.u32 %v110, 7
    %v112 = vsub.s32 1, %v111
    %v113 = vrot.slane %v31, %v112
    %v114 = vmul.f32 %v97, %v101
    %v115 = vmul.f32 %v96, %v105
    %v116 = vmul.f32 %v95, %v109
    %v117 = vmul.f32 %v94, %v113
    %s118 = scalar_lea.vmem %s2, 8
    %v119 = vld [vmem:[%s118] sm:$0xff]
    %121 = vset.pattern.permute.xlu0 0
    %122 = vperm.xlu0 %121, %v119
    %v123 = vpop.permute.xlu0 %122
    %v125 = vmul.f32 %v123, %v114
    %v126 = vmul.f32 %v123, %v115
    %v127 = vmul.f32 %v123, %v116
    %v128 = vmul.f32 %v123, %v117
    %v129 = vadd.f32 %v81, %v125
    %v130 = vadd.f32 %v82, %v126
    %v131 = vadd.f32 %v83, %v127
    %v132 = vadd.f32 %v84, %v128
    %133 = vrot.lane.b32.xlu0 %v24, 15
    %v134 = vpop.permute.xlu0 %133
    %135 = vrot.lane.b32.xlu0 %v25, 15
    %v136 = vpop.permute.xlu0 %135
    %137 = vrot.lane.b32.xlu0 %v26, 15
    %v138 = vpop.permute.xlu0 %137
    %139 = vrot.lane.b32.xlu0 %v27, 15
    %v140 = vpop.permute.xlu0 %139
    %vm141 = vcmp.lt.s32.totalorder %v45, 15
    %v142 = vsel %vm141, %v138, %v140
    %v143 = vsel %vm141, %v136, %v138
    %v144 = vsel %vm141, %v134, %v136
    %v145 = vsel %vm141, %v140, %v134
    %v146 = vlaneseq
    %v147 = vshrl.u32 %v146, 7
    %v148 = vsub.s32 2, %v147
    %v149 = vrot.slane %v28, %v148
    %v150 = vlaneseq
    %v151 = vshrl.u32 %v150, 7
    %v152 = vsub.s32 2, %v151
    %v153 = vrot.slane %v29, %v152
    %v154 = vlaneseq
    %v155 = vshrl.u32 %v154, 7
    %v156 = vsub.s32 2, %v155
    %v157 = vrot.slane %v30, %v156
    %v158 = vlaneseq
    %v159 = vshrl.u32 %v158, 7
    %v160 = vsub.s32 2, %v159
    %v161 = vrot.slane %v31, %v160
    %v162 = vmul.f32 %v145, %v149
    %v163 = vmul.f32 %v144, %v153
    %v164 = vmul.f32 %v143, %v157
    %v165 = vmul.f32 %v142, %v161
    %s166 = scalar_lea.vmem %s2, 16
    %v167 = vld [vmem:[%s166] sm:$0xff]
    %169 = vset.pattern.permute.xlu0 0
    %170 = vperm.xlu0 %169, %v167
    %v171 = vpop.permute.xlu0 %170
    %v173 = vmul.f32 %v171, %v162
    %v174 = vmul.f32 %v171, %v163
    %v175 = vmul.f32 %v171, %v164
    %v176 = vmul.f32 %v171, %v165
    %v177 = vadd.f32 %v129, %v173
    %v178 = vadd.f32 %v130, %v174
    %v179 = vadd.f32 %v131, %v175
    %v180 = vadd.f32 %v132, %v176
    %181 = vrot.lane.b32.xlu0 %v24, 1
    %v182 = vpop.permute.xlu0 %181
    %183 = vrot.lane.b32.xlu0 %v25, 1
    %v184 = vpop.permute.xlu0 %183
    %185 = vrot.lane.b32.xlu0 %v26, 1
    %v186 = vpop.permute.xlu0 %185
    %187 = vrot.lane.b32.xlu0 %v27, 1
    %v188 = vpop.permute.xlu0 %187
    %vm189 = vcmp.lt.s32.totalorder %v45, 1
    %v190 = vsel %vm189, %v186, %v188
    %v191 = vsel %vm189, %v184, %v186
    %v192 = vsel %vm189, %v182, %v184
    %v193 = vsel %vm189, %v188, %v182
    %v194 = vlaneseq
    %v195 = vshrl.u32 %v194, 7
    %v196 = vsub.s32 3, %v195
    %v197 = vrot.slane %v28, %v196
    %v198 = vlaneseq
    %v199 = vshrl.u32 %v198, 7
    %v200 = vsub.s32 3, %v199
    %v201 = vrot.slane %v29, %v200
    %v202 = vlaneseq
    %v203 = vshrl.u32 %v202, 7
    %v204 = vsub.s32 3, %v203
    %v205 = vrot.slane %v30, %v204
    %v206 = vlaneseq
    %v207 = vshrl.u32 %v206, 7
    %v208 = vsub.s32 3, %v207
    %v209 = vrot.slane %v31, %v208
    %v210 = vmul.f32 %v193, %v197
    %v211 = vmul.f32 %v192, %v201
    %v212 = vmul.f32 %v191, %v205
    %v213 = vmul.f32 %v190, %v209
    %s214 = scalar_lea.vmem %s2, 24
    %v215 = vld [vmem:[%s214] sm:$0xff]
    %217 = vset.pattern.permute.xlu0 0
    %218 = vperm.xlu0 %217, %v215
    %v219 = vpop.permute.xlu0 %218
    %v221 = vmul.f32 %v219, %v210
    %v222 = vmul.f32 %v219, %v211
    %v223 = vmul.f32 %v219, %v212
    %v224 = vmul.f32 %v219, %v213
    %v225 = vadd.f32 %v177, %v221
    %v226 = vadd.f32 %v178, %v222
    %v227 = vadd.f32 %v179, %v223
    %v228 = vadd.f32 %v180, %v224
    %s229 = scalar_lea.vmem %s2, 32
    %v230 = vld [vmem:[%s229] sm:$0xff]
    %232 = vset.pattern.permute.xlu0 0
    %233 = vperm.xlu0 %232, %v230
    %v234 = vpop.permute.xlu0 %233
    %v236 = vmul.f32 %v234, %v24
    %v237 = vmul.f32 %v234, %v25
    %v238 = vmul.f32 %v234, %v26
    %v239 = vmul.f32 %v234, %v27
    %v240 = vadd.f32 %v225, %v236
    %v241 = vadd.f32 %v226, %v237
    %v242 = vadd.f32 %v227, %v238
    %v243 = vadd.f32 %v228, %v239
    %244 = vrot.lane.b32.xlu0 %v24, 127
    %v245 = vpop.permute.xlu0 %244
    %246 = vrot.lane.b32.xlu0 %v25, 127
    %v247 = vpop.permute.xlu0 %246
    %248 = vrot.lane.b32.xlu0 %v26, 127
    %v249 = vpop.permute.xlu0 %248
    %250 = vrot.lane.b32.xlu0 %v27, 127
    %v251 = vpop.permute.xlu0 %250
    %vm252 = vcmp.lt.s32.totalorder %v45, 127
    %v253 = vsel %vm252, %v249, %v251
    %v254 = vsel %vm252, %v247, %v249
    %v255 = vsel %vm252, %v245, %v247
    %v256 = vsel %vm252, %v251, %v245
    %v257 = vlaneseq
    %v258 = vshrl.u32 %v257, 7
    %v259 = vsub.s32 5, %v258
    %v260 = vrot.slane %v28, %v259
    %v261 = vlaneseq
    %v262 = vshrl.u32 %v261, 7
    %v263 = vsub.s32 5, %v262
    %v264 = vrot.slane %v29, %v263
    %v265 = vlaneseq
    %v266 = vshrl.u32 %v265, 7
    %v267 = vsub.s32 5, %v266
    %v268 = vrot.slane %v30, %v267
    %v269 = vlaneseq
    %v270 = vshrl.u32 %v269, 7
    %v271 = vsub.s32 5, %v270
    %v272 = vrot.slane %v31, %v271
    %v273 = vmul.f32 %v255, %v260
    %v274 = vmul.f32 %v254, %v264
    %v275 = vmul.f32 %v253, %v268
    %v276 = vmul.f32 %v256, %v272
    %s277 = scalar_lea.vmem %s2, 40
    %v278 = vld [vmem:[%s277] sm:$0xff]
    %280 = vset.pattern.permute.xlu0 0
    %281 = vperm.xlu0 %280, %v278
    %v282 = vpop.permute.xlu0 %281
    %v284 = vmul.f32 %v282, %v273
    %v285 = vmul.f32 %v282, %v274
    %v286 = vmul.f32 %v282, %v275
    %v287 = vmul.f32 %v282, %v276
    %v288 = vadd.f32 %v240, %v284
    %v289 = vadd.f32 %v241, %v285
    %v290 = vadd.f32 %v242, %v286
    %v291 = vadd.f32 %v243, %v287
    %292 = vrot.lane.b32.xlu0 %v24, 113
    %v293 = vpop.permute.xlu0 %292
    %294 = vrot.lane.b32.xlu0 %v25, 113
    %v295 = vpop.permute.xlu0 %294
    %296 = vrot.lane.b32.xlu0 %v26, 113
    %v297 = vpop.permute.xlu0 %296
    %298 = vrot.lane.b32.xlu0 %v27, 113
    %v299 = vpop.permute.xlu0 %298
    %vm300 = vcmp.lt.s32.totalorder %v45, 113
    %v301 = vsel %vm300, %v297, %v299
    %v302 = vsel %vm300, %v295, %v297
    %v303 = vsel %vm300, %v293, %v295
    %v304 = vsel %vm300, %v299, %v293
    %v305 = vlaneseq
    %v306 = vshrl.u32 %v305, 7
    %v307 = vsub.s32 6, %v306
    %v308 = vrot.slane %v28, %v307
    %v309 = vlaneseq
    %v310 = vshrl.u32 %v309, 7
    %v311 = vsub.s32 6, %v310
    %v312 = vrot.slane %v29, %v311
    %v313 = vlaneseq
    %v314 = vshrl.u32 %v313, 7
    %v315 = vsub.s32 6, %v314
    %v316 = vrot.slane %v30, %v315
    %v317 = vlaneseq
    %v318 = vshrl.u32 %v317, 7
    %v319 = vsub.s32 6, %v318
    %v320 = vrot.slane %v31, %v319
    %v321 = vmul.f32 %v303, %v308
    %v322 = vmul.f32 %v302, %v312
    %v323 = vmul.f32 %v301, %v316
    %v324 = vmul.f32 %v304, %v320
    %s325 = scalar_lea.vmem %s2, 48
    %v326 = vld [vmem:[%s325] sm:$0xff]
    %328 = vset.pattern.permute.xlu0 0
    %329 = vperm.xlu0 %328, %v326
    %v330 = vpop.permute.xlu0 %329
    %v332 = vmul.f32 %v330, %v321
    %v333 = vmul.f32 %v330, %v322
    %v334 = vmul.f32 %v330, %v323
    %v335 = vmul.f32 %v330, %v324
    %v336 = vadd.f32 %v288, %v332
    %v337 = vadd.f32 %v289, %v333
    %v338 = vadd.f32 %v290, %v334
    %v339 = vadd.f32 %v291, %v335
    %340 = vrot.lane.b32.xlu0 %v24, 112
    %v341 = vpop.permute.xlu0 %340
    %342 = vrot.lane.b32.xlu0 %v25, 112
    %v343 = vpop.permute.xlu0 %342
    %344 = vrot.lane.b32.xlu0 %v26, 112
    %v345 = vpop.permute.xlu0 %344
    %346 = vrot.lane.b32.xlu0 %v27, 112
    %v347 = vpop.permute.xlu0 %346
    %vm348 = vcmp.lt.s32.totalorder %v45, 112
    %v349 = vsel %vm348, %v345, %v347
    %v350 = vsel %vm348, %v343, %v345
    %v351 = vsel %vm348, %v341, %v343
    %v352 = vsel %vm348, %v347, %v341
    %v353 = vlaneseq
    %v354 = vshrl.u32 %v353, 7
    %v355 = vsub.s32 7, %v354
    %v356 = vrot.slane %v28, %v355
    %v357 = vlaneseq
    %v358 = vshrl.u32 %v357, 7
    %v359 = vsub.s32 7, %v358
    %v360 = vrot.slane %v29, %v359
    %v361 = vlaneseq
    %v362 = vshrl.u32 %v361, 7
    %v363 = vsub.s32 7, %v362
    %v364 = vrot.slane %v30, %v363
    %v365 = vlaneseq
    %v366 = vshrl.u32 %v365, 7
    %v367 = vsub.s32 7, %v366
    %v368 = vrot.slane %v31, %v367
    %v369 = vmul.f32 %v351, %v356
    %v370 = vmul.f32 %v350, %v360
    %v371 = vmul.f32 %v349, %v364
    %v372 = vmul.f32 %v352, %v368
    %s373 = scalar_lea.vmem %s2, 56
    %v374 = vld [vmem:[%s373] sm:$0xff]
    %376 = vset.pattern.permute.xlu0 0
    %377 = vperm.xlu0 %376, %v374
    %v378 = vpop.permute.xlu0 %377
    %v380 = vmul.f32 %v378, %v369
    %v381 = vmul.f32 %v378, %v370
    %v382 = vmul.f32 %v378, %v371
    %v383 = vmul.f32 %v378, %v372
    %v384 = vadd.f32 %v336, %v380
    %v385 = vadd.f32 %v337, %v381
    %v386 = vadd.f32 %v338, %v382
    %v387 = vadd.f32 %v339, %v383
    %388 = vrot.lane.b32.xlu0 %v24, 111
    %v389 = vpop.permute.xlu0 %388
    %390 = vrot.lane.b32.xlu0 %v25, 111
    %v391 = vpop.permute.xlu0 %390
    %392 = vrot.lane.b32.xlu0 %v26, 111
    %v393 = vpop.permute.xlu0 %392
    %394 = vrot.lane.b32.xlu0 %v27, 111
    %v395 = vpop.permute.xlu0 %394
    %vm396 = vcmp.lt.s32.totalorder %v45, 111
    %v397 = vsel %vm396, %v393, %v395
    %v398 = vsel %vm396, %v391, %v393
    %v399 = vsel %vm396, %v389, %v391
    %v400 = vsel %vm396, %v395, %v389
    %v401 = vlaneseq
    %v402 = vshrl.u32 %v401, 7
    %v403 = vsub.s32 0, %v402
    %v404 = vrot.slane %v32, %v403
    %v405 = vlaneseq
    %v406 = vshrl.u32 %v405, 7
    %v407 = vsub.s32 0, %v406
    %v408 = vrot.slane %v33, %v407
    %v409 = vlaneseq
    %v410 = vshrl.u32 %v409, 7
    %v411 = vsub.s32 0, %v410
    %v412 = vrot.slane %v34, %v411
    %v413 = vlaneseq
    %v414 = vshrl.u32 %v413, 7
    %v415 = vsub.s32 0, %v414
    %v416 = vrot.slane %v35, %v415
    %v417 = vmul.f32 %v399, %v404
    %v418 = vmul.f32 %v398, %v408
    %v419 = vmul.f32 %v397, %v412
    %v420 = vmul.f32 %v400, %v416
    %s421 = scalar_lea.vmem %s2, 64
    %v422 = vld [vmem:[%s421] sm:$0xff]
    %424 = vset.pattern.permute.xlu0 0
    %425 = vperm.xlu0 %424, %v422
    %v426 = vpop.permute.xlu0 %425
    %v428 = vmul.f32 %v426, %v417
    %v429 = vmul.f32 %v426, %v418
    %v430 = vmul.f32 %v426, %v419
    %v431 = vmul.f32 %v426, %v420
    %v432 = vadd.f32 %v384, %v428
    %v433 = vadd.f32 %v385, %v429
    %v434 = vadd.f32 %v386, %v430
    %v435 = vadd.f32 %v387, %v431
    %v436 = vld [vmem:[%s3] sm:$0xff]
    %438 = vset.pattern.permute.xlu0 0
    %439 = vperm.xlu0 %438, %v436
    %v440 = vpop.permute.xlu0 %439
    %v442 = vadd.f32 %v432, %v440
    %v443 = vadd.f32 %v433, %v440
    %v444 = vadd.f32 %v434, %v440
    %v445 = vadd.f32 %v435, %v440
    %v446 = vmax.f32 %v442, 0.0
    %v447 = vmax.f32 %v443, 0.0
    %v448 = vmax.f32 %v444, 0.0
    %v449 = vmax.f32 %v445, 0.0
    %v450 = vld [vmem:[%s4] sm:$0xff]
    %v451 = vld [vmem:[%s5] sm:$0xff]
    %453 = vset.pattern.permute.xlu0 0
    %454 = vperm.xlu0 %453, %v451
    %v455 = vpop.permute.xlu0 %454
    %vm457 = vcmask 64512
    %v459 = vsel %vm457, %v450, 0
    %461 = vmatprep.subr.mxu0 %v447
    %462 = vmatpush1.msra.mxu0 %v446
    %463 = vmatprep.subr.mxu0 0.0
    %464 = vmatpush1.msra.mxu0 0.0
    %465 = vmatprep.subr.mxu0 0.0
    %466 = vmatpush1.msra.mxu0 0.0
    %467 = vmatprep.subr.mxu0 0.0
    %468 = vmatpush1.msra.mxu0 0.0
    %469 = vmatprep.subr.mxu0 0.0
    %470 = vmatpush1.msra.mxu0 0.0
    %471 = vmatprep.subr.mxu0 0.0
    %472 = vmatpush1.msra.mxu0 0.0
    %473 = vmatprep.subr.mxu0 0.0
    %474 = vmatpush1.msra.mxu0 0.0
    %475 = vmatprep.subr.mxu0 0.0
    %476 = vmatpush1.msra.mxu0 0.0
    %477 = vmatprep.subr.mxu0 0.0
    %478 = vmatpush1.msra.mxu0 0.0
    %479 = vmatprep.subr.mxu0 0.0
    %480 = vmatpush1.msra.mxu0 0.0
    %481 = vmatprep.subr.mxu0 0.0
    %482 = vmatpush1.msra.mxu0 0.0
    %483 = vmatprep.subr.mxu0 0.0
    %484 = vmatpush1.msra.mxu0 0.0
    %485 = vmatprep.subr.mxu0 0.0
    %486 = vmatpush1.msra.mxu0 0.0
    %487 = vmatprep.subr.mxu0 0.0
    %488 = vmatpush1.msra.mxu0 0.0
    %489 = vmatprep.subr.mxu0 0.0
    %490 = vmatpush1.msra.mxu0 0.0
    %491 = vmatprep.subr.mxu0 0.0
    %492 = vmatpush1.msra.mxu0 0.0
    %493 = vmatprep.subr.mxu0 0.0
    %494 = vmatpush1.msra.mxu0 0.0
    %495 = vmatprep.subr.mxu0 0.0
    %496 = vmatpush1.msra.mxu0 0.0
    %497 = vmatprep.subr.mxu0 0.0
    %498 = vmatpush1.msra.mxu0 0.0
    %499 = vmatprep.subr.mxu0 0.0
    %500 = vmatpush1.msra.mxu0 0.0
    %501 = vmatprep.subr.mxu0 0.0
    %502 = vmatpush1.msra.mxu0 0.0
    %503 = vmatprep.subr.mxu0 0.0
    %504 = vmatpush1.msra.mxu0 0.0
    %505 = vmatprep.subr.mxu0 0.0
    %506 = vmatpush1.msra.mxu0 0.0
    %507 = vmatprep.subr.mxu0 0.0
    %508 = vmatpush1.msra.mxu0 0.0
    %509 = vmatprep.subr.mxu0 0.0
    %510 = vmatpush1.msra.mxu0 0.0
    %511 = vmatprep.subr.mxu0 0.0
    %512 = vmatpush1.msra.mxu0 0.0
    %513 = vmatprep.subr.mxu0 0.0
    %514 = vmatpush1.msra.mxu0 0.0
    %515 = vmatprep.subr.mxu0 0.0
    %516 = vmatpush1.msra.mxu0 0.0
    %517 = vmatprep.subr.mxu0 0.0
    %518 = vmatpush1.msra.mxu0 0.0
    %519 = vmatprep.subr.mxu0 0.0
    %520 = vmatpush1.msra.mxu0 0.0
    %521 = vmatprep.subr.mxu0 0.0
    %522 = vmatpush1.msra.mxu0 0.0
    %523 = vmatprep.subr.mxu0 0.0
    %524 = vmatpush1.msra.mxu0 0.0
    %525 = vmatprep.mubr.f32.mxu0 0.0
    %526 = vmatmul.mubr.f32.gmra.mrb[0].mxu0 %v459
    %v527 = vpop.f32.mrb[0].mxu0
    %v528 = vadd.f32 %v455, %v527
    %v529 = vpop.f32.mrb[0].mxu0
    %v530 = vadd.f32 %v455, %v529
    %531 = vdwg.mxu0
    %532 = vmatprep.subr.mxu0 %v449
    %533 = vmatpush1.msra.mxu0 %v448
    %534 = vmatprep.subr.mxu0 0.0
    %535 = vmatpush1.msra.mxu0 0.0
    %536 = vmatprep.subr.mxu0 0.0
    %537 = vmatpush1.msra.mxu0 0.0
    %538 = vmatprep.subr.mxu0 0.0
    %539 = vmatpush1.msra.mxu0 0.0
    %540 = vmatprep.subr.mxu0 0.0
    %541 = vmatpush1.msra.mxu0 0.0
    %542 = vmatprep.subr.mxu0 0.0
    %543 = vmatpush1.msra.mxu0 0.0
    %544 = vmatprep.subr.mxu0 0.0
    %545 = vmatpush1.msra.mxu0 0.0
    %546 = vmatprep.subr.mxu0 0.0
    %547 = vmatpush1.msra.mxu0 0.0
    %548 = vmatprep.subr.mxu0 0.0
    %549 = vmatpush1.msra.mxu0 0.0
    %550 = vmatprep.subr.mxu0 0.0
    %551 = vmatpush1.msra.mxu0 0.0
    %552 = vmatprep.subr.mxu0 0.0
    %553 = vmatpush1.msra.mxu0 0.0
    %554 = vmatprep.subr.mxu0 0.0
    %555 = vmatpush1.msra.mxu0 0.0
    %556 = vmatprep.subr.mxu0 0.0
    %557 = vmatpush1.msra.mxu0 0.0
    %558 = vmatprep.subr.mxu0 0.0
    %559 = vmatpush1.msra.mxu0 0.0
    %560 = vmatprep.subr.mxu0 0.0
    %561 = vmatpush1.msra.mxu0 0.0
    %562 = vmatprep.subr.mxu0 0.0
    %563 = vmatpush1.msra.mxu0 0.0
    %564 = vmatprep.subr.mxu0 0.0
    %565 = vmatpush1.msra.mxu0 0.0
    %566 = vmatprep.subr.mxu0 0.0
    %567 = vmatpush1.msra.mxu0 0.0
    %568 = vmatprep.subr.mxu0 0.0
    %569 = vmatpush1.msra.mxu0 0.0
    %570 = vmatprep.subr.mxu0 0.0
    %571 = vmatpush1.msra.mxu0 0.0
    %572 = vmatprep.subr.mxu0 0.0
    %573 = vmatpush1.msra.mxu0 0.0
    %574 = vmatprep.subr.mxu0 0.0
    %575 = vmatpush1.msra.mxu0 0.0
    %576 = vmatprep.subr.mxu0 0.0
    %577 = vmatpush1.msra.mxu0 0.0
    %578 = vmatprep.subr.mxu0 0.0
    %579 = vmatpush1.msra.mxu0 0.0
    %580 = vmatprep.subr.mxu0 0.0
    %581 = vmatpush1.msra.mxu0 0.0
    %582 = vmatprep.subr.mxu0 0.0
    %583 = vmatpush1.msra.mxu0 0.0
    %584 = vmatprep.subr.mxu0 0.0
    %585 = vmatpush1.msra.mxu0 0.0
    %586 = vmatprep.subr.mxu0 0.0
    %587 = vmatpush1.msra.mxu0 0.0
    %588 = vmatprep.subr.mxu0 0.0
    %589 = vmatpush1.msra.mxu0 0.0
    %590 = vmatprep.subr.mxu0 0.0
    %591 = vmatpush1.msra.mxu0 0.0
    %592 = vmatprep.subr.mxu0 0.0
    %593 = vmatpush1.msra.mxu0 0.0
    %594 = vmatprep.subr.mxu0 0.0
    %595 = vmatpush1.msra.mxu0 0.0
    %596 = vmatprep.mubr.f32.mxu0 0.0
    %597 = vmatmul.mubr.f32.gmra.mrb[0].mxu0 %v459
    %v598 = vpop.f32.mrb[0].mxu0
    %v599 = vadd.f32 %v455, %v598
    %v600 = vpop.f32.mrb[0].mxu0
    %v601 = vadd.f32 %v455, %v600
    %602 = vdwg.mxu0
    %v603 = vmax.f32 %v528, 0.0
    %v604 = vmax.f32 %v530, 0.0
    %v605 = vmax.f32 %v599, 0.0
    %v606 = vmax.f32 %v601, 0.0
    %v607 = vadd.f32 %v603, %v24
    %v608 = vadd.f32 %v604, %v25
    %v609 = vadd.f32 %v605, %v26
    %v610 = vadd.f32 %v606, %v27
    %611 = vst [vmem:[#allocation2] sm:$0xff] %v607
    %612 = vst [vmem:[#allocation2 + $0x8] sm:$0xff] %v608
    %613 = vst [vmem:[#allocation2 + $0x10] sm:$0xff] %v609
    %614 = vst [vmem:[#allocation2 + $0x18] sm:$0xff] %v610
    // Predicated region
    $region26: #{tpu_custom_call.1} parent=1 // pred_check
      _
    $region27: #{tpu_custom_call.1} parent=1 // pred_check_branch
      %616 = sbr.rel (0) target = $region29
    $region28: #{tpu_custom_call.1} parent=1 // pred_region
      %s618 = ssub.s32 512, 512
      %619 = vsyncadd [#allocation3], %s618
      %s621 = sshll.u32 [#allocation2], 4
      %s622 = int_to_ptr.vmem [resolvable:$true] %s621
      %624 = dma.vmem_to_hbm [thread:$0]  %s622, 512, %s6, [#allocation3]
    $region29: #{tpu_custom_call.1} parent=1 // pred_fallthru
      _
    // Predicated region
    $region30: #{tpu_custom_call.1} parent=1 // pred_check
      _
    $region31: #{tpu_custom_call.1} parent=1 // pred_check_branch
      %626 = sbr.rel (0) target = $region33
    $region32: #{tpu_custom_call.1} parent=1 // pred_region
      %627 = dma.done [#allocation3], 512
    $region33: #{tpu_custom_call.1} parent=1 // pred_fallthru
      _
    %628 = vsyncpa [#allocation3], 1

</llo_original>
